<compile_context>
chip_gen: v5e
topology: v5e:2x2
jax: 0.10.0
libtpu: 0.0.40
codegen_flags: <defaults>
</compile_context>

<pallas_src>
import functools
import math

import jax
import jax.numpy as jnp
from jax import lax
from jax.experimental import pallas as pl
from jax.experimental.pallas import tpu as pltpu

_EPS = 1e-5          # eps for BN / IN / GN / LayerNorm (PyTorch default)
_PIX_EPS = 1e-12     # eps for F.normalize (PyTorch default)


# ----------------------------------------------------------------------------
# Tile-size / VMEM helpers
# ----------------------------------------------------------------------------
def _vmem_cap_bytes():
    try:
        cap = int(pltpu.get_tpu_info().vmem_capacity_bytes)
        if cap > 0:
            return cap
    except Exception:
        pass
    return 64 * 1024 * 1024          # v7x per-TensorCore minimum


_VMEM_CAP = _vmem_cap_bytes()
# Target x-block footprint (f32-equivalent elements). ~2 MiB blocks are well
# past the measured HBM-roofline knee while leaving pipelining headroom even
# on v7x's 64 MiB VMEM.
_BLOCK_ELEMS = max(64 * 1024, min(2 * 1024 * 1024, _VMEM_CAP // 24)) // 4 * 1


def _sublane_multiple(dtype):
    """Sublane packing multiple for a dtype (f32: 8, bf16: 16, int8: 32)."""
    itemsize = max(1, jnp.dtype(dtype).itemsize)
    return max(8, 32 // itemsize)


def _pick_tile(extent, max_tile, multiple):
    """Largest t with t | extent, t <= max_tile and (t % multiple == 0 or
    t == extent).  Falls back to the full extent (always a legal block)."""
    extent, max_tile = int(extent), int(max_tile)
    if extent <= max_tile:
        return extent
    best = 0
    d = 1
    while d * d <= extent:
        if extent % d == 0:
            for t in (d, extent // d):
                if t <= max_tile and t % multiple == 0 and t > best:
                    best = t
        d += 1
    return best if best > 0 else extent


def _params(dim_semantics, *block_bytes):
    """CompilerParams with a vmem limit sized from the real block footprint."""
    need = 32 * 1024 * 1024
    for b in block_bytes:
        need = max(need, 10 * int(b))
    limit = int(min(need, _VMEM_CAP * 4 // 5))
    return pltpu.CompilerParams(dimension_semantics=dim_semantics,
                                vmem_limit_bytes=limit)


# ----------------------------------------------------------------------------
# Kernels
# ----------------------------------------------------------------------------
def _norm_affine_kernel(x_ref, g_ref, b_ref, o_ref, *, eps, axes):
    """Mean/var normalization over `axes` of the block + fused affine FMA."""
    x = x_ref[...].astype(jnp.float32)
    mean = jnp.mean(x, axis=axes, keepdims=True)
    var = jnp.mean(jnp.square(x - mean), axis=axes, keepdims=True)   # biased
    inv = lax.rsqrt(var + eps)
    scale = inv * g_ref[...].astype(jnp.float32)
    shift = b_ref[...].astype(jnp.float32) - mean * scale
    o_ref[...] = (x * scale + shift).astype(o_ref.dtype)


def _pixel_norm_kernel(x_ref, o_ref, *, eps):
    """L2-normalize every pixel (lane) over the channel (sublane) axis."""
    x = x_ref[...].astype(jnp.float32)                   # (1, C, TP)
    ssq = jnp.sum(x * x, axis=1, keepdims=True)          # (1, 1, TP)
    inv = lax.rsqrt(jnp.maximum(ssq, eps * eps))         # == 1/max(||x||, eps)
    o_ref[...] = (x * inv).astype(o_ref.dtype)


def _bn_stats_kernel(x_ref, g_ref, b_ref, scale_ref, shift_ref,
                     sum_sc, ssq_sc, *, eps, inv_count):
    """Accumulate per-channel sum / sum-of-squares over (N, HW) tiles, then
    emit fused per-channel scale/shift on the last grid step."""
    n = pl.program_id(0)
    t = pl.program_id(1)

    @pl.when(jnp.logical_and(n == 0, t == 0))
    def _init():
        sum_sc[...] = jnp.zeros_like(sum_sc)
        ssq_sc[...] = jnp.zeros_like(ssq_sc)

    x = x_ref[...].astype(jnp.float32)                    # (1, C, TP)
    sum_sc[...] += jnp.sum(x, axis=2, keepdims=True)
    ssq_sc[...] += jnp.sum(x * x, axis=2, keepdims=True)

    last = jnp.logical_and(n == pl.num_programs(0) - 1,
                           t == pl.num_programs(1) - 1)

    @pl.when(last)
    def _finalize():
        mean = sum_sc[...] * inv_count
        # Single-pass E[x^2]-mean^2; clamp guards the (rare) cancellation case.
        var = jnp.maximum(ssq_sc[...] * inv_count - mean * mean, 0.0)
        scale = g_ref[...] * lax.rsqrt(var + eps)
        scale_ref[...] = scale
        shift_ref[...] = b_ref[...] - mean * scale


def _scale_shift_kernel(x_ref, scale_ref, shift_ref, o_ref):
    """Elementwise y = x * scale[c] + shift[c]."""
    x = x_ref[...].astype(jnp.float32)                    # (1, TC, THW)
    o_ref[...] = (x * scale_ref[...] + shift_ref[...]).astype(o_ref.dtype)


# ----------------------------------------------------------------------------
# Per-norm wrappers (pure-JAX glue is only free reshapes)
# ----------------------------------------------------------------------------
def _instance_norm(x, weight, bias):
    N, C, H, W = x.shape
    HW = H * W
    x3 = x.reshape(N, C, HW)
    g3 = weight.reshape(1, C, 1)
    b3 = bias.reshape(1, C, 1)

    sub = _sublane_multiple(x.dtype)
    # Reduction over HW must live in one block; budget the channel tile.
    # (Very large HW per instance can exceed the budget; accepted trade-off.)
    max_c = max(sub, _BLOCK_ELEMS // max(1, HW))
    TC = _pick_tile(C, max_c, sub)
    grid = (N, C // TC)
    blk = TC * HW * 4

    y3 = pl.pallas_call(
        functools.partial(_norm_affine_kernel, eps=_EPS, axes=(2,)),
        out_shape=jax.ShapeDtypeStruct((N, C, HW), x.dtype),
        grid=grid,
        in_specs=[pl.BlockSpec((1, TC, HW), lambda n, c: (n, c, 0)),
                  pl.BlockSpec((1, TC, 1), lambda n, c: (0, c, 0)),
                  pl.BlockSpec((1, TC, 1), lambda n, c: (0, c, 0))],
        out_specs=pl.BlockSpec((1, TC, HW), lambda n, c: (n, c, 0)),
        compiler_params=_params(("parallel", "parallel"), blk),
    )(x3, g3, b3)
    return y3.reshape(N, C, H, W)


def _group_norm(x, weight, bias, groups=32):
    N, C, H, W = x.shape
    assert C % groups == 0, "GroupNorm(32, C) requires C % 32 == 0"
    Cg = C // groups
    HW = H * W
    R = N * groups
    x3 = x.reshape(R, Cg, HW)
    g3 = weight.reshape(groups, Cg, 1)
    b3 = bias.reshape(groups, Cg, 1)

    # TR divides `groups`, so a row block never crosses a sample boundary and
    # the affine can be indexed with (block % blocks_per_sample) -- no tiling
    # of the parameters is materialized.
    max_r = max(1, _BLOCK_ELEMS // max(1, Cg * HW))
    TR = _pick_tile(groups, max_r, 1)
    gpb = groups // TR
    grid = (R // TR,)
    blk = TR * Cg * HW * 4

    y3 = pl.pallas_call(
        functools.partial(_norm_affine_kernel, eps=_EPS, axes=(1, 2)),
        out_shape=jax.ShapeDtypeStruct((R, Cg, HW), x.dtype),
        grid=grid,
        in_specs=[pl.BlockSpec((TR, Cg, HW), lambda i: (i, 0, 0)),
                  pl.BlockSpec((TR, Cg, 1), lambda i: (i % gpb, 0, 0)),
                  pl.BlockSpec((TR, Cg, 1), lambda i: (i % gpb, 0, 0))],
        out_specs=pl.BlockSpec((TR, Cg, HW), lambda i: (i, 0, 0)),
        compiler_params=_params(("parallel",), blk),
    )(x3, g3, b3)
    return y3.reshape(N, C, H, W)


def _layer_norm(x, weight, bias, normalize_shape):
    shp = (tuple(normalize_shape) if isinstance(normalize_shape, (tuple, list))
           else (normalize_shape,))
    shp = tuple(int(s) for s in shp)
    K = math.prod(shp)
    lead = x.shape[:x.ndim - len(shp)]
    R = math.prod(lead) if lead else 1

    x2 = x.reshape(R, K)
    g2 = weight.reshape(1, K)
    b2 = bias.reshape(1, K)

    sub = _sublane_multiple(x.dtype)
    max_r = max(sub, _BLOCK_ELEMS // max(1, K))
    if R >= 2 * sub:
        # keep >= 2 grid steps so both v7x TensorCores get work
        max_r = max(sub, min(max_r, R // 2))
    TR = _pick_tile(R, max_r, sub)
    grid = (R // TR,)
    blk = TR * K * 4

    y2 = pl.pallas_call(
        functools.partial(_norm_affine_kernel, eps=_EPS, axes=(1,)),
        out_shape=jax.ShapeDtypeStruct((R, K), x.dtype),
        grid=grid,
        in_specs=[pl.BlockSpec((TR, K), lambda i: (i, 0)),
                  pl.BlockSpec((1, K), lambda i: (0, 0)),
                  pl.BlockSpec((1, K), lambda i: (0, 0))],
        out_specs=pl.BlockSpec((TR, K), lambda i: (i, 0)),
        compiler_params=_params(("parallel",), blk),
    )(x2, g2, b2)
    return y2.reshape(x.shape)


def _pixel_norm(x):
    N, C, H, W = x.shape
    HW = H * W
    x3 = x.reshape(N, C, HW)                 # no transpose: C on sublanes

    max_p = max(1, _BLOCK_ELEMS // max(1, C))
    TP = _pick_tile(HW, max_p, 128)
    grid = (N, HW // TP)
    blk = C * TP * 4

    y3 = pl.pallas_call(
        functools.partial(_pixel_norm_kernel, eps=_PIX_EPS),
        out_shape=jax.ShapeDtypeStruct((N, C, HW), x.dtype),
        grid=grid,
        in_specs=[pl.BlockSpec((1, C, TP), lambda n, p: (n, 0, p))],
        out_specs=pl.BlockSpec((1, C, TP), lambda n, p: (n, 0, p)),
        compiler_params=_params(("parallel", "parallel"), blk),
    )(x3)
    return y3.reshape(N, C, H, W)


def _batch_norm(x, weight, bias):
    """Train-mode BatchNorm2d: stats pass (1 read) + apply pass (1 read + 1
    write), no full-tensor transposes."""
    N, C, H, W = x.shape
    HW = H * W
    x3 = x.reshape(N, C, HW)
    g3 = weight.astype(jnp.float32).reshape(1, C, 1)
    b3 = bias.astype(jnp.float32).reshape(1, C, 1)
    inv_count = 1.0 / float(N * HW)

    # ---- pass 1: per-channel fused scale/shift from batch statistics -------
    max_p = max(1, _BLOCK_ELEMS // max(1, C))
    TP = _pick_tile(HW, max_p, 128)
    stats_grid = (N, HW // TP)
    blk1 = C * TP * 4

    scale, shift = pl.pallas_call(
        functools.partial(_bn_stats_kernel, eps=_EPS, inv_count=inv_count),
        out_shape=(jax.ShapeDtypeStruct((1, C, 1), jnp.float32),
                   jax.ShapeDtypeStruct((1, C, 1), jnp.float32)),
        grid=stats_grid,
        in_specs=[pl.BlockSpec((1, C, TP), lambda n, p: (n, 0, p)),
                  pl.BlockSpec((1, C, 1), lambda n, p: (0, 0, 0)),
                  pl.BlockSpec((1, C, 1), lambda n, p: (0, 0, 0))],
        out_specs=(pl.BlockSpec((1, C, 1), lambda n, p: (0, 0, 0)),
                   pl.BlockSpec((1, C, 1), lambda n, p: (0, 0, 0))),
        scratch_shapes=[pltpu.VMEM((1, C, 1), jnp.float32),
                        pltpu.VMEM((1, C, 1), jnp.float32)],
        compiler_params=_params(("arbitrary", "arbitrary"), blk1),
    )(x3, g3, b3)

    # ---- pass 2: y = x * scale[c] + shift[c] --------------------------------
    sub = _sublane_multiple(x.dtype)
    max_c = max(1, _BLOCK_ELEMS // max(1, HW))
    if max_c >= sub or max_c >= C:
        TC = _pick_tile(C, max_c, sub)
        THW = HW
    else:                                   # very large HW: tile lanes instead
        TC = _pick_tile(C, sub, sub)
        THW = _pick_tile(HW, max(1, _BLOCK_ELEMS // TC), 128)
    apply_grid = (N, C // TC, HW // THW)
    blk2 = TC * THW * 4

    y3 = pl.pallas_call(
        _scale_shift_kernel,
        out_shape=jax.ShapeDtypeStruct((N, C, HW), x.dtype),
        grid=apply_grid,
        in_specs=[pl.BlockSpec((1, TC, THW), lambda n, c, p: (n, c, p)),
                  pl.BlockSpec((1, TC, 1), lambda n, c, p: (0, c, 0)),
                  pl.BlockSpec((1, TC, 1), lambda n, c, p: (0, c, 0))],
        out_specs=pl.BlockSpec((1, TC, THW), lambda n, c, p: (n, c, p)),
        compiler_params=_params(("parallel", "parallel", "parallel"), blk2),
    )(x3, scale, shift)
    return y3.reshape(N, C, H, W)


# ----------------------------------------------------------------------------
# NormLayer: params + forward
# ----------------------------------------------------------------------------
def init_norm_params(channels, norm_type, normalize_shape=None,
                     dtype=jnp.float32):
    """Deterministic init identical to PyTorch defaults (weight=1, bias=0)."""
    norm_type = norm_type.lower()
    if norm_type in ("bn", "in", "gn"):
        return {"weight": jnp.ones((channels,), dtype),
                "bias": jnp.zeros((channels,), dtype)}
    if norm_type == "layer":
        shp = (normalize_shape if isinstance(normalize_shape, (tuple, list))
               else (normalize_shape,))
        shp = tuple(int(s) for s in shp)
        return {"weight": jnp.ones(shp, dtype),
                "bias": jnp.zeros(shp, dtype)}
    return {}


def norm_layer_forward(x, params, norm_type, normalize_shape=None):
    norm_type = norm_type.lower()
    if norm_type == "none":
        return x
    if norm_type == "bn":
        # TODO(synk): running-mean/var buffers (eval-mode BN) are not modeled;
        # this is train-mode batch statistics only, matching the reference.
        return _batch_norm(x, params["weight"], params["bias"])
    if norm_type == "in":
        return _instance_norm(x, params["weight"], params["bias"])
    if norm_type == "gn":
        return _group_norm(x, params["weight"], params["bias"], groups=32)
    if norm_type == "pixel":
        return _pixel_norm(x)
    if norm_type == "layer":
        return _layer_norm(x, params["weight"], params["bias"],
                           normalize_shape)
    raise AssertionError("Norm type {} not support.".format(norm_type))


# ----------------------------------------------------------------------------
# Pure-JAX references (for correctness checks only)
# ----------------------------------------------------------------------------
def _ref_forward(x, params, norm_type, normalize_shape=None):
    if norm_type == "none":
        return x
    if norm_type == "bn":
        m = x.mean(axis=(0, 2, 3), keepdims=True)
        v = x.var(axis=(0, 2, 3), keepdims=True)
        y = (x - m) / jnp.sqrt(v + _EPS)
        return y * params["weight"][None, :, None, None] + \
            params["bias"][None, :, None, None]
    if norm_type == "in":
        m = x.mean(axis=(2, 3), keepdims=True)
        v = x.var(axis=(2, 3), keepdims=True)
        y = (x - m) / jnp.sqrt(v + _EPS)
        return y * params["weight"][None, :, None, None] + \
            params["bias"][None, :, None, None]
    if norm_type == "gn":
        G = 32
        N, C, H, W = x.shape
        xg = x.reshape(N, G, C // G, H, W)
        m = xg.mean(axis=(2, 3, 4), keepdims=True)
        v = xg.var(axis=(2, 3, 4), keepdims=True)
        y = ((xg - m) / jnp.sqrt(v + _EPS)).reshape(N, C, H, W)
        return y * params["weight"][None, :, None, None] + \
            params["bias"][None, :, None, None]
    if norm_type == "pixel":
        nrm = jnp.sqrt(jnp.sum(x * x, axis=1, keepdims=True))
        return x / jnp.maximum(nrm, _PIX_EPS)
    if norm_type == "layer":
        shp = (normalize_shape if isinstance(normalize_shape, (tuple, list))
               else (normalize_shape,))
        axes = tuple(range(x.ndim - len(shp), x.ndim))
        m = x.mean(axis=axes, keepdims=True)
        v = x.var(axis=axes, keepdims=True)
        y = (x - m) / jnp.sqrt(v + _EPS)
        return y * params["weight"] + params["bias"]
    raise AssertionError(norm_type)


# ----------------------------------------------------------------------------
if __name__ == "__main__":
    key = jax.random.PRNGKey(0)
    N, C, H, W = 2, 64, 8, 8           # C divisible by 32 for GroupNorm(32, C)
    x = jax.random.normal(key, (N, C, H, W), dtype=jnp.float32)

    layer_shape = (H, W)               # LayerNorm over the trailing (H, W) dims

    configs = [
        ("bn", None),
        ("in", None),
        ("gn", None),
        ("pixel", None),
        ("layer", layer_shape),
        ("none", None),
    ]

    for norm_type, nshape in configs:
        params = init_norm_params(C, norm_type, nshape)
        out = norm_layer_forward(x, params, norm_type, nshape)
        out = jax.block_until_ready(out)
        ref = _ref_forward(x, params, norm_type, nshape)
        assert out.shape == x.shape and out.dtype == x.dtype
        assert jnp.allclose(out, ref, atol=1e-4, rtol=1e-4), \
            f"mismatch for norm_type={norm_type}"

    print("KERNEL_OK")
</pallas_src>

<mosaic_0001>
module attributes {stable_mosaic.version = 11 : i64} {
  func.func @_bn_stats_kernel(%arg0: i32, %arg1: i32, %arg2: memref<1x64x64xf32, #tpu.memory_space<vmem>>, %arg3: memref<1x64x1xf32, #tpu.memory_space<vmem>>, %arg4: memref<1x64x1xf32, #tpu.memory_space<vmem>>, %arg5: memref<1x64x1xf32, #tpu.memory_space<vmem>>, %arg6: memref<1x64x1xf32, #tpu.memory_space<vmem>>, %arg7: memref<1x64x1xf32, #tpu.memory_space<vmem>>, %arg8: memref<1x64x1xf32, #tpu.memory_space<vmem>>) attributes {dimension_semantics = [#tpu.dimension_semantics<arbitrary>, #tpu.dimension_semantics<arbitrary>], iteration_bounds = array<i64: 2, 1>, scalar_prefetch = 0 : i64, scratch_operands = 2 : i64, tpu.core_type = #tpu.core_type<tc>, window_params = [{transform_indices = @transform_0, window_bounds = array<i64: 1, 64, 64>}, {pipeline_mode = #tpu.pipeline_mode<synchronous>, transform_indices = @transform_1, window_bounds = array<i64: 1, 64, 1>}, {pipeline_mode = #tpu.pipeline_mode<synchronous>, transform_indices = @transform_2, window_bounds = array<i64: 1, 64, 1>}, {pipeline_mode = #tpu.pipeline_mode<synchronous>, transform_indices = @transform_3, window_bounds = array<i64: 1, 64, 1>}, {pipeline_mode = #tpu.pipeline_mode<synchronous>, transform_indices = @transform_4, window_bounds = array<i64: 1, 64, 1>}]} {
    %c0_i32 = arith.constant 0 : i32
    %0 = arith.cmpi eq, %arg0, %c0_i32 : i32
    %c0_i32_0 = arith.constant 0 : i32
    %1 = arith.cmpi eq, %arg1, %c0_i32_0 : i32
    %2 = arith.andi %0, %1 : i1
    %3 = arith.extui %2 : i1 to i32
    %c0_i32_1 = arith.constant 0 : i32
    %4 = arith.cmpi ne, %3, %c0_i32_1 : i32
    scf.if %4 {
      %cst_19 = arith.constant 0.000000e+00 : f32
      %22 = vector.broadcast %cst_19 : f32 to vector<1x64x1xf32>
      %c0_20 = arith.constant 0 : index
      %c0_21 = arith.constant 0 : index
      %c0_22 = arith.constant 0 : index
      %23 = vector.load %arg7[%c0_20, %c0_21, %c0_22] : memref<1x64x1xf32, #tpu.memory_space<vmem>>, vector<1x64x1xf32>
      tpu.vector_store %arg7[%c0_20, %c0_21, %c0_22], %22 {strides = array<i32>} : memref<1x64x1xf32, #tpu.memory_space<vmem>>, vector<1x64x1xf32>,
      %cst_23 = arith.constant 0.000000e+00 : f32
      %24 = vector.broadcast %cst_23 : f32 to vector<1x64x1xf32>
      %c0_24 = arith.constant 0 : index
      %c0_25 = arith.constant 0 : index
      %c0_26 = arith.constant 0 : index
      %25 = vector.load %arg8[%c0_24, %c0_25, %c0_26] : memref<1x64x1xf32, #tpu.memory_space<vmem>>, vector<1x64x1xf32>
      tpu.vector_store %arg8[%c0_24, %c0_25, %c0_26], %24 {strides = array<i32>} : memref<1x64x1xf32, #tpu.memory_space<vmem>>, vector<1x64x1xf32>,
    } else {
    }
    %c0 = arith.constant 0 : index
    %c0_2 = arith.constant 0 : index
    %c0_3 = arith.constant 0 : index
    %5 = vector.load %arg2[%c0, %c0_2, %c0_3] : memref<1x64x64xf32, #tpu.memory_space<vmem>>, vector<1x64x64xf32>
    %c0_4 = arith.constant 0 : index
    %c0_5 = arith.constant 0 : index
    %c0_6 = arith.constant 0 : index
    %6 = vector.load %arg7[%c0_4, %c0_5, %c0_6] : memref<1x64x1xf32, #tpu.memory_space<vmem>>, vector<1x64x1xf32>
    %cst = arith.constant dense<0.000000e+00> : vector<1x64xf32>
    %7 = vector.multi_reduction <add>, %5, %cst [2] : vector<1x64x64xf32> to vector<1x64xf32>
    %8 = vector.shape_cast %7 : vector<1x64xf32> to vector<1x64x1xf32>
    %9 = arith.addf %6, %8 : vector<1x64x1xf32>
    %c0_7 = arith.constant 0 : index
    %c0_8 = arith.constant 0 : index
    %c0_9 = arith.constant 0 : index
    %10 = vector.load %arg7[%c0_7, %c0_8, %c0_9] : memref<1x64x1xf32, #tpu.memory_space<vmem>>, vector<1x64x1xf32>
    tpu.vector_store %arg7[%c0_7, %c0_8, %c0_9], %9 {strides = array<i32>} : memref<1x64x1xf32, #tpu.memory_space<vmem>>, vector<1x64x1xf32>,
    %c0_10 = arith.constant 0 : index
    %c0_11 = arith.constant 0 : index
    %c0_12 = arith.constant 0 : index
    %11 = vector.load %arg8[%c0_10, %c0_11, %c0_12] : memref<1x64x1xf32, #tpu.memory_space<vmem>>, vector<1x64x1xf32>
    %12 = arith.mulf %5, %5 : vector<1x64x64xf32>
    %cst_13 = arith.constant dense<0.000000e+00> : vector<1x64xf32>
    %13 = vector.multi_reduction <add>, %12, %cst_13 [2] : vector<1x64x64xf32> to vector<1x64xf32>
    %14 = vector.shape_cast %13 : vector<1x64xf32> to vector<1x64x1xf32>
    %15 = arith.addf %11, %14 : vector<1x64x1xf32>
    %c0_14 = arith.constant 0 : index
    %c0_15 = arith.constant 0 : index
    %c0_16 = arith.constant 0 : index
    %16 = vector.load %arg8[%c0_14, %c0_15, %c0_16] : memref<1x64x1xf32, #tpu.memory_space<vmem>>, vector<1x64x1xf32>
    tpu.vector_store %arg8[%c0_14, %c0_15, %c0_16], %15 {strides = array<i32>} : memref<1x64x1xf32, #tpu.memory_space<vmem>>, vector<1x64x1xf32>,
    %c1_i32 = arith.constant 1 : i32
    %17 = arith.cmpi eq, %arg0, %c1_i32 : i32
    %c0_i32_17 = arith.constant 0 : i32
    %18 = arith.cmpi eq, %arg1, %c0_i32_17 : i32
    %19 = arith.andi %17, %18 : i1
    %20 = arith.extui %19 : i1 to i32
    %c0_i32_18 = arith.constant 0 : i32
    %21 = arith.cmpi ne, %20, %c0_i32_18 : i32
    scf.if %21 {
      %c0_19 = arith.constant 0 : index
      %c0_20 = arith.constant 0 : index
      %c0_21 = arith.constant 0 : index
      %22 = vector.load %arg7[%c0_19, %c0_20, %c0_21] : memref<1x64x1xf32, #tpu.memory_space<vmem>>, vector<1x64x1xf32>
      %cst_22 = arith.constant 7.812500e-03 : f32
      %23 = vector.broadcast %cst_22 : f32 to vector<1x64x1xf32>
      %24 = arith.mulf %22, %23 : vector<1x64x1xf32>
      %c0_23 = arith.constant 0 : index
      %c0_24 = arith.constant 0 : index
      %c0_25 = arith.constant 0 : index
      %25 = vector.load %arg8[%c0_23, %c0_24, %c0_25] : memref<1x64x1xf32, #tpu.memory_space<vmem>>, vector<1x64x1xf32>
      %cst_26 = arith.constant 7.812500e-03 : f32
      %26 = vector.broadcast %cst_26 : f32 to vector<1x64x1xf32>
      %27 = arith.mulf %25, %26 : vector<1x64x1xf32>
      %28 = arith.mulf %24, %24 : vector<1x64x1xf32>
      %29 = arith.subf %27, %28 : vector<1x64x1xf32>
      %cst_27 = arith.constant 0.000000e+00 : f32
      %30 = vector.broadcast %cst_27 : f32 to vector<1x64x1xf32>
      %31 = arith.maximumf %29, %30 : vector<1x64x1xf32>
      %c0_28 = arith.constant 0 : index
      %c0_29 = arith.constant 0 : index
      %c0_30 = arith.constant 0 : index
      %32 = vector.load %arg3[%c0_28, %c0_29, %c0_30] : memref<1x64x1xf32, #tpu.memory_space<vmem>>, vector<1x64x1xf32>
      %cst_31 = arith.constant 9.99999974E-6 : f32
      %33 = vector.broadcast %cst_31 : f32 to vector<1x64x1xf32>
      %34 = arith.addf %31, %33 : vector<1x64x1xf32>
      %35 = math.rsqrt %34 : vector<1x64x1xf32>
      %36 = arith.mulf %32, %35 : vector<1x64x1xf32>
      %c0_32 = arith.constant 0 : index
      %c0_33 = arith.constant 0 : index
      %c0_34 = arith.constant 0 : index
      %37 = vector.load %arg5[%c0_32, %c0_33, %c0_34] : memref<1x64x1xf32, #tpu.memory_space<vmem>>, vector<1x64x1xf32>
      tpu.vector_store %arg5[%c0_32, %c0_33, %c0_34], %36 {strides = array<i32>} : memref<1x64x1xf32, #tpu.memory_space<vmem>>, vector<1x64x1xf32>,
      %c0_35 = arith.constant 0 : index
      %c0_36 = arith.constant 0 : index
      %c0_37 = arith.constant 0 : index
      %38 = vector.load %arg4[%c0_35, %c0_36, %c0_37] : memref<1x64x1xf32, #tpu.memory_space<vmem>>, vector<1x64x1xf32>
      %39 = arith.mulf %24, %36 : vector<1x64x1xf32>
      %40 = arith.subf %38, %39 : vector<1x64x1xf32>
      %c0_38 = arith.constant 0 : index
      %c0_39 = arith.constant 0 : index
      %c0_40 = arith.constant 0 : index
      %41 = vector.load %arg6[%c0_38, %c0_39, %c0_40] : memref<1x64x1xf32, #tpu.memory_space<vmem>>, vector<1x64x1xf32>
      tpu.vector_store %arg6[%c0_38, %c0_39, %c0_40], %40 {strides = array<i32>} : memref<1x64x1xf32, #tpu.memory_space<vmem>>, vector<1x64x1xf32>,
    } else {
    }
    return
  }
  func.func @transform_0(%arg0: i32, %arg1: i32) -> (i32, i32, i32) {
    %c0_i32 = arith.constant 0 : i32
    %c0_i32_0 = arith.constant 0 : i32
    return %arg0, %c0_i32, %arg1 : i32, i32, i32
  }
  func.func @transform_1(%arg0: i32, %arg1: i32) -> (i32, i32, i32) {
    %c0_i32 = arith.constant 0 : i32
    %c0_i32_0 = arith.constant 0 : i32
    %c0_i32_1 = arith.constant 0 : i32
    %c0_i32_2 = arith.constant 0 : i32
    return %c0_i32, %c0_i32_0, %c0_i32_1 : i32, i32, i32
  }
  func.func @transform_2(%arg0: i32, %arg1: i32) -> (i32, i32, i32) {
    %c0_i32 = arith.constant 0 : i32
    %c0_i32_0 = arith.constant 0 : i32
    %c0_i32_1 = arith.constant 0 : i32
    %c0_i32_2 = arith.constant 0 : i32
    return %c0_i32, %c0_i32_0, %c0_i32_1 : i32, i32, i32
  }
  func.func @transform_3(%arg0: i32, %arg1: i32) -> (i32, i32, i32) {
    %c0_i32 = arith.constant 0 : i32
    %c0_i32_0 = arith.constant 0 : i32
    %c0_i32_1 = arith.constant 0 : i32
    %c0_i32_2 = arith.constant 0 : i32
    return %c0_i32, %c0_i32_0, %c0_i32_1 : i32, i32, i32
  }
  func.func @transform_4(%arg0: i32, %arg1: i32) -> (i32, i32, i32) {
    %c0_i32 = arith.constant 0 : i32
    %c0_i32_0 = arith.constant 0 : i32
    %c0_i32_1 = arith.constant 0 : i32
    %c0_i32_2 = arith.constant 0 : i32
    return %c0_i32, %c0_i32_0, %c0_i32_1 : i32, i32, i32
  }
}

</mosaic_0001>

<llo_original>
// kernel: tpu_custom_call.1
$region0: #{tpu_custom_call.1}
  #allocation0 [shape = 'u32[]', space=smem, size = 0x4, offset = 0x4, fixed_abs, tag = 'smem constant byte address 0x4 - core index']
  #allocation1 [shape = 'u32[72,128]{1,0:T(1,128)}', space=vmem, size = 0x9000, scoped, tag = 'internal scratch']
  #allocation2 [shape = 'f32[1,64,1]{2,1,0:T(8,128)}', space=vmem, size = 0x8000, scoped, tag = 'scratch operand']
  #allocation3 [shape = 'f32[1,64,1]{2,1,0:T(8,128)}', space=vmem, size = 0x8000, scoped, tag = 'scratch operand']
  %s0 = inlined_call_operand.vmem [shape: f32[2,64,64], index: 0, kind: input, shape index: {}]
  %s1 = inlined_call_operand.vmem [shape: f32[1,64,1], index: 1, kind: input, shape index: {}]
  %s2 = inlined_call_operand.vmem [shape: f32[1,64,1], index: 2, kind: input, shape index: {}]
  %s3 = inlined_call_operand.vmem [shape: f32[1,64,1], index: 3, kind: output, shape index: {0}]
  %s4 = inlined_call_operand.vmem [shape: f32[1,64,1], index: 4, kind: output, shape index: {1}]
  %5 = xla_tuple %s3, %s4
  %s6 = sld [smem:[#allocation0]]
  $region61: #{tpu_custom_call.1} parent=0
    _
  %s8 = ssub.s32 1, %s6
  %s9 = scalar_select 0, %s8, %s6
  loop: start=0, step=1, limit=4
  $region2: #{tpu_custom_call.1} parent=0 // loop_pre_header
    _
  $region3: #{tpu_custom_call.1} parent=0 // loop_header
    %s11 = sphi 0, %s15
    %p12 = scmp.ge.s32.totalorder %s11, 4
    %s18 = sphi 0, %s30
    %s19 = sphi 0, %s26
    %s20 = sphi 0, %s18
    %s21 = sphi 0, %s19
    %s22 = sphi 0, %s20
    %s23 = sphi 0, %s21
    %s35 = sphi 0, %s37
    %s38 = sphi 0, %s35
    %s39 = sphi 0, %s38
    %s55 = sphi 0, %s39
    %s59 = sphi 0, %s59
    %s61 = sphi 0, %s59
    %s62 = sphi 0, %s61
    %s76 = sphi 0, %s62
    %s80 = sphi 0, %s80
    %s82 = sphi 0, %s80
    %s83 = sphi 0, %s82
    %s97 = sphi 0, %s83
    %s101 = sphi 0, %s101
    %s103 = sphi 0, %s101
    %s104 = sphi 0, %s103
    %s118 = sphi 0, %s104
    %s122 = sphi 0, %s122
    %s124 = sphi 0, %s122
    %s125 = sphi 0, %s124
    %s139 = sphi 0, %s125
  $region4: #{tpu_custom_call.1} parent=0 // loop_header_branch
    %14 = sbr.rel (%p12) target = $region8
  $region5: #{tpu_custom_call.1} parent=0 // loop_body
    %s16 = ssub.s32 %s11, 1
    %s17 = ssub.s32 %s11, 2
    %s24 = sadd.s32 1, %s19
    %p25 = scmp.ge.s32.totalorder %s24, 1
    %s26 = scalar_select %p25, 0, %s24
    %s27 = sadd.s32 1, %s18
    %s28 = scalar_select %p25, %s27, %s18
    %p29 = scmp.ge.s32.totalorder %s28, 2
    %s30 = scalar_select %p29, 0, %s28
    %s31 = ssub.s32 %s18, %s30
    %s32 = ssub.s32 %s19, %s26
    %s33 = sor.u32 %s31, %s32
    %p34 = scmp.eq.s32.totalorder %s33, 0
    %s36 = sadd.s32 %s35, 1
    %s37 = scalar_select %p34, %s35, %s36
    %p40 = pneg %p34
    %p41 = scmp.eq.s32.totalorder %s11, 1
    %p42 = por %p40, %p41
    %p43 = scmp.ne.s32.totalorder %s35, %s38
    %p44 = scmp.eq.s32.totalorder %s11, 0
    %p45 = por %p43, %p44
    %p46 = scmp.ne.s32.totalorder %s35, %s38
    %p47 = scmp.eq.s32.totalorder %s16, 1
    %p48 = por %p46, %p47
    %p49 = scmp.ne.s32.totalorder %s38, %s39
    %p50 = scmp.eq.s32.totalorder %s16, 0
    %p51 = por %p49, %p50
    %p52 = scmp.ne.s32.totalorder %s38, %s39
    %p53 = scmp.eq.s32.totalorder %s17, 1
    %p54 = por %p52, %p53
    %p56 = scmp.ne.s32.totalorder %s39, %s55
    %p57 = scmp.eq.s32.totalorder %s17, 0
    %p58 = por %p56, %p57
    %s60 = sadd.s32 %s59, 1
    %p63 = scmp.eq.s32.totalorder %s11, 1
    %p64 = scmp.ne.s32.totalorder %s59, %s61
    %p65 = scmp.eq.s32.totalorder %s11, 0
    %p66 = por %p64, %p65
    %p67 = scmp.ne.s32.totalorder %s59, %s61
    %p68 = scmp.eq.s32.totalorder %s16, 1
    %p69 = por %p67, %p68
    %p70 = scmp.ne.s32.totalorder %s61, %s62
    %p71 = scmp.eq.s32.totalorder %s16, 0
    %p72 = por %p70, %p71
    %p73 = scmp.ne.s32.totalorder %s61, %s62
    %p74 = scmp.eq.s32.totalorder %s17, 1
    %p75 = por %p73, %p74
    %p77 = scmp.ne.s32.totalorder %s62, %s76
    %p78 = scmp.eq.s32.totalorder %s17, 0
    %p79 = por %p77, %p78
    %s81 = sadd.s32 %s80, 1
    %p84 = scmp.eq.s32.totalorder %s11, 1
    %p85 = scmp.ne.s32.totalorder %s80, %s82
    %p86 = scmp.eq.s32.totalorder %s11, 0
    %p87 = por %p85, %p86
    %p88 = scmp.ne.s32.totalorder %s80, %s82
    %p89 = scmp.eq.s32.totalorder %s16, 1
    %p90 = por %p88, %p89
    %p91 = scmp.ne.s32.totalorder %s82, %s83
    %p92 = scmp.eq.s32.totalorder %s16, 0
    %p93 = por %p91, %p92
    %p94 = scmp.ne.s32.totalorder %s82, %s83
    %p95 = scmp.eq.s32.totalorder %s17, 1
    %p96 = por %p94, %p95
    %p98 = scmp.ne.s32.totalorder %s83, %s97
    %p99 = scmp.eq.s32.totalorder %s17, 0
    %p100 = por %p98, %p99
    %s102 = sadd.s32 %s101, 1
    %p105 = scmp.eq.s32.totalorder %s11, 1
    %p106 = scmp.ne.s32.totalorder %s101, %s103
    %p107 = scmp.eq.s32.totalorder %s11, 0
    %p108 = por %p106, %p107
    %p109 = scmp.ne.s32.totalorder %s101, %s103
    %p110 = scmp.eq.s32.totalorder %s16, 1
    %p111 = por %p109, %p110
    %p112 = scmp.ne.s32.totalorder %s103, %s104
    %p113 = scmp.eq.s32.totalorder %s16, 0
    %p114 = por %p112, %p113
    %p115 = scmp.ne.s32.totalorder %s103, %s104
    %p116 = scmp.eq.s32.totalorder %s17, 1
    %p117 = por %p115, %p116
    %p119 = scmp.ne.s32.totalorder %s104, %s118
    %p120 = scmp.eq.s32.totalorder %s17, 0
    %p121 = por %p119, %p120
    %s123 = sadd.s32 %s122, 1
    %p126 = scmp.eq.s32.totalorder %s11, 1
    %p127 = scmp.ne.s32.totalorder %s122, %s124
    %p128 = scmp.eq.s32.totalorder %s11, 0
    %p129 = por %p127, %p128
    %p130 = scmp.ne.s32.totalorder %s122, %s124
    %p131 = scmp.eq.s32.totalorder %s16, 1
    %p132 = por %p130, %p131
    %p133 = scmp.ne.s32.totalorder %s124, %s125
    %p134 = scmp.eq.s32.totalorder %s16, 0
    %p135 = por %p133, %p134
    %p136 = scmp.ne.s32.totalorder %s124, %s125
    %p137 = scmp.eq.s32.totalorder %s17, 1
    %p138 = por %p136, %p137
    %p140 = scmp.ne.s32.totalorder %s125, %s139
    %p141 = scmp.eq.s32.totalorder %s17, 0
    %p142 = por %p140, %p141
    %p143 = scmp.le.s32.totalorder 1, %s11
    %p144 = scmp.lt.s32.totalorder %s11, 3
    %p145 = pnand %p143, %p144
    %p146 = pneg %p145
    // Predicated region
    $region9: #{tpu_custom_call.1} parent=5 // pred_check
      _
    $region10: #{tpu_custom_call.1} parent=5 // pred_check_branch
      %148 = sbr.rel (%p145) target = $region12
    $region11: #{tpu_custom_call.1} parent=5 // pred_region
      %s149 = ssub.s32 %s11, 1
      // Predicated region
      $region13: #{tpu_custom_call.1} parent=11 // pred_check
        %p150 = pneg %p72
      $region14: #{tpu_custom_call.1} parent=11 // pred_check_branch
        %152 = sbr.rel (%p150) target = $region16
      $region15: #{tpu_custom_call.1} parent=11 // pred_region
        _
      $region16: #{tpu_custom_call.1} parent=11 // pred_fallthru
        _
      // Predicated region
      $region17: #{tpu_custom_call.1} parent=11 // pred_check
        %p153 = pneg %p93
      $region18: #{tpu_custom_call.1} parent=11 // pred_check_branch
        %155 = sbr.rel (%p153) target = $region20
      $region19: #{tpu_custom_call.1} parent=11 // pred_region
        _
      $region20: #{tpu_custom_call.1} parent=11 // pred_fallthru
        _
    $region12: #{tpu_custom_call.1} parent=5 // pred_fallthru
      _
    %p156 = scmp.lt.s32.totalorder %s11, 2
    // Predicated region
    $region21: #{tpu_custom_call.1} parent=5 // pred_check
      %p157 = pneg %p156
    $region22: #{tpu_custom_call.1} parent=5 // pred_check_branch
      %159 = sbr.rel (%p157) target = $region24
    $region23: #{tpu_custom_call.1} parent=5 // pred_region
      // Predicated region
      $region25: #{tpu_custom_call.1} parent=23 // pred_check
        %p160 = pneg %p45
      $region26: #{tpu_custom_call.1} parent=23 // pred_check_branch
        %162 = sbr.rel (%p160) target = $region28
      $region27: #{tpu_custom_call.1} parent=23 // pred_region
        %p163 = scmp.lt.s32.totalorder %s18, 1
        %s164 = scalar_select %p163, %s18, 1
        %p165 = scmp.lt.s32.totalorder %s19, 0
        %s166 = scalar_select %p165, %s19, 0
        %s167 = smul.addr %s164, 8
        %s168 = sadd.s32 %s166, %s167
        %s169 = smul.addr %s168, 8
        %s170 = scalar_lea.vmem %s0, %s169
      $region28: #{tpu_custom_call.1} parent=23 // pred_fallthru
        _
    $region24: #{tpu_custom_call.1} parent=5 // pred_fallthru
      _
    %p171 = scmp.le.s32.totalorder 1, %s11
    %p172 = scmp.lt.s32.totalorder %s11, 3
    %p173 = pnand %p171, %p172
    %p174 = pneg %p173
    // Predicated region
    $region29: #{tpu_custom_call.1} parent=5 // pred_check
      _
    $region30: #{tpu_custom_call.1} parent=5 // pred_check_branch
      %176 = sbr.rel (%p173) target = $region32
    $region31: #{tpu_custom_call.1} parent=5 // pred_region
      %s177 = ssub.s32 %s11, 1
      %p178 = scmp.lt.s32.totalorder %s20, 1
      %s179 = scalar_select %p178, %s20, 1
      %p180 = scmp.lt.s32.totalorder %s21, 0
      %s181 = scalar_select %p180, %s21, 0
      %s182 = smul.addr %s179, 8
      %s183 = sadd.s32 %s181, %s182
      %s184 = smul.addr %s183, 8
      %s185 = scalar_lea.vmem %s0, %s184
      %p186 = pneg %p51
      %p187 = pneg %p48
      %p188 = pneg %p72
      %p189 = pneg %p69
      %p190 = pneg %p93
      %p191 = pneg %p90
      %p192 = pneg %p114
      %p193 = pneg %p111
      %p194 = pneg %p135
      %p195 = pneg %p132
      %p196 = scmp.lt.s32.totalorder %s20, 1
      %s197 = scalar_select %p196, %s20, 1
      %p198 = scmp.lt.s32.totalorder %s21, 0
      %s199 = scalar_select %p198, %s21, 0
      %s200 = smul.addr %s197, 8
      %s201 = sadd.s32 %s199, %s200
      %s202 = smul.addr %s201, 8
      %s203 = scalar_lea.vmem %s0, %s202
      %p204 = scmp.eq.s32.totalorder %s20, 0
      %p205 = scmp.eq.s32.totalorder %s21, 0
      %p206 = pnand %p204, %p205
      %p207 = pneg %p206
      // Predicated region
      $region33: #{tpu_custom_call.1} parent=31 // pred_check
        _
      $region34: #{tpu_custom_call.1} parent=31 // pred_check_branch
        %209 = sbr.rel (%p206) target = $region36
      $region35: #{tpu_custom_call.1} parent=31 // pred_region
        %vm210 = vcmask 7168
        %211 = vst.msk [vmem:[#allocation2] sm:$0xff] %vm210, 0.0
        %212 = vst.msk [vmem:[#allocation2 + $0x8] sm:$0xff] %vm210, 0.0
        %213 = vst.msk [vmem:[#allocation2 + $0x10] sm:$0xff] %vm210, 0.0
        %214 = vst.msk [vmem:[#allocation2 + $0x18] sm:$0xff] %vm210, 0.0
        %215 = vst.msk [vmem:[#allocation2 + $0x20] sm:$0xff] %vm210, 0.0
        %216 = vst.msk [vmem:[#allocation2 + $0x28] sm:$0xff] %vm210, 0.0
        %217 = vst.msk [vmem:[#allocation2 + $0x30] sm:$0xff] %vm210, 0.0
        %218 = vst.msk [vmem:[#allocation2 + $0x38] sm:$0xff] %vm210, 0.0
        %219 = vst.msk [vmem:[#allocation3] sm:$0xff] %vm210, 0.0
        %220 = vst.msk [vmem:[#allocation3 + $0x8] sm:$0xff] %vm210, 0.0
        %221 = vst.msk [vmem:[#allocation3 + $0x10] sm:$0xff] %vm210, 0.0
        %222 = vst.msk [vmem:[#allocation3 + $0x18] sm:$0xff] %vm210, 0.0
        %223 = vst.msk [vmem:[#allocation3 + $0x20] sm:$0xff] %vm210, 0.0
        %224 = vst.msk [vmem:[#allocation3 + $0x28] sm:$0xff] %vm210, 0.0
        %225 = vst.msk [vmem:[#allocation3 + $0x30] sm:$0xff] %vm210, 0.0
        %226 = vst.msk [vmem:[#allocation3 + $0x38] sm:$0xff] %vm210, 0.0
      $region36: #{tpu_custom_call.1} parent=31 // pred_fallthru
        _
      %v227 = vld [vmem:[%s203] sm:$0xff]
      %v228 = vld [vmem:[%s203 + $0x8] sm:$0xff]
      %v229 = vld [vmem:[%s203 + $0x10] sm:$0xff]
      %v230 = vld [vmem:[%s203 + $0x18] sm:$0xff]
      %v231 = vld [vmem:[%s203 + $0x20] sm:$0xff]
      %v232 = vld [vmem:[%s203 + $0x28] sm:$0xff]
      %v233 = vld [vmem:[%s203 + $0x30] sm:$0xff]
      %v234 = vld [vmem:[%s203 + $0x38] sm:$0xff]
      %v235 = vld [vmem:[#allocation2] sm:$0xff]
      %v236 = vld [vmem:[#allocation2 + $0x8] sm:$0xff]
      %v237 = vld [vmem:[#allocation2 + $0x10] sm:$0xff]
      %v238 = vld [vmem:[#allocation2 + $0x18] sm:$0xff]
      %v239 = vld [vmem:[#allocation2 + $0x20] sm:$0xff]
      %v240 = vld [vmem:[#allocation2 + $0x28] sm:$0xff]
      %v241 = vld [vmem:[#allocation2 + $0x30] sm:$0xff]
      %v242 = vld [vmem:[#allocation2 + $0x38] sm:$0xff]
      %vm243 = vcmask 523264
      %v244 = vsel %vm243, %v227, 0.0
      %245 = vadd.xlane.f32.xlu0 %v244
      %v246 = vpop.xlane.xlu0 %245
      %v247 = vsel %vm243, %v228, 0.0
      %248 = vadd.xlane.f32.xlu0 %v247
      %v249 = vpop.xlane.xlu0 %248
      %v250 = vsel %vm243, %v229, 0.0
      %251 = vadd.xlane.f32.xlu0 %v250
      %v252 = vpop.xlane.xlu0 %251
      %v253 = vsel %vm243, %v230, 0.0
      %254 = vadd.xlane.f32.xlu0 %v253
      %v255 = vpop.xlane.xlu0 %254
      %v256 = vsel %vm243, %v231, 0.0
      %257 = vadd.xlane.f32.xlu0 %v256
      %v258 = vpop.xlane.xlu0 %257
      %v259 = vsel %vm243, %v232, 0.0
      %260 = vadd.xlane.f32.xlu0 %v259
      %v261 = vpop.xlane.xlu0 %260
      %v262 = vsel %vm243, %v233, 0.0
      %263 = vadd.xlane.f32.xlu0 %v262
      %v264 = vpop.xlane.xlu0 %263
      %v265 = vsel %vm243, %v234, 0.0
      %266 = vadd.xlane.f32.xlu0 %v265
      %v267 = vpop.xlane.xlu0 %266
      %v268 = vadd.f32 %v235, %v246
      %v269 = vadd.f32 %v236, %v249
      %v270 = vadd.f32 %v237, %v252
      %v271 = vadd.f32 %v238, %v255
      %v272 = vadd.f32 %v239, %v258
      %v273 = vadd.f32 %v240, %v261
      %v274 = vadd.f32 %v241, %v264
      %v275 = vadd.f32 %v242, %v267
      %vm276 = vcmask 7168
      %277 = vst.msk [vmem:[#allocation2] sm:$0xff] %vm276, %v268
      %278 = vst.msk [vmem:[#allocation2 + $0x8] sm:$0xff] %vm276, %v269
      %279 = vst.msk [vmem:[#allocation2 + $0x10] sm:$0xff] %vm276, %v270
      %280 = vst.msk [vmem:[#allocation2 + $0x18] sm:$0xff] %vm276, %v271
      %281 = vst.msk [vmem:[#allocation2 + $0x20] sm:$0xff] %vm276, %v272
      %282 = vst.msk [vmem:[#allocation2 + $0x28] sm:$0xff] %vm276, %v273
      %283 = vst.msk [vmem:[#allocation2 + $0x30] sm:$0xff] %vm276, %v274
      %284 = vst.msk [vmem:[#allocation2 + $0x38] sm:$0xff] %vm276, %v275
      %v285 = vld [vmem:[#allocation3] sm:$0xff]
      %v286 = vld [vmem:[#allocation3 + $0x8] sm:$0xff]
      %v287 = vld [vmem:[#allocation3 + $0x10] sm:$0xff]
      %v288 = vld [vmem:[#allocation3 + $0x18] sm:$0xff]
      %v289 = vld [vmem:[#allocation3 + $0x20] sm:$0xff]
      %v290 = vld [vmem:[#allocation3 + $0x28] sm:$0xff]
      %v291 = vld [vmem:[#allocation3 + $0x30] sm:$0xff]
      %v292 = vld [vmem:[#allocation3 + $0x38] sm:$0xff]
      %v293 = vmul.f32 %v227, %v227
      %v294 = vmul.f32 %v228, %v228
      %v295 = vmul.f32 %v229, %v229
      %v296 = vmul.f32 %v230, %v230
      %v297 = vmul.f32 %v231, %v231
      %v298 = vmul.f32 %v232, %v232
      %v299 = vmul.f32 %v233, %v233
      %v300 = vmul.f32 %v234, %v234
      %v301 = vsel %vm243, %v293, 0.0
      %302 = vadd.xlane.f32.xlu0 %v301
      %v303 = vpop.xlane.xlu0 %302
      %v304 = vsel %vm243, %v294, 0.0
      %305 = vadd.xlane.f32.xlu0 %v304
      %v306 = vpop.xlane.xlu0 %305
      %v307 = vsel %vm243, %v295, 0.0
      %308 = vadd.xlane.f32.xlu0 %v307
      %v309 = vpop.xlane.xlu0 %308
      %v310 = vsel %vm243, %v296, 0.0
      %311 = vadd.xlane.f32.xlu0 %v310
      %v312 = vpop.xlane.xlu0 %311
      %v313 = vsel %vm243, %v297, 0.0
      %314 = vadd.xlane.f32.xlu0 %v313
      %v315 = vpop.xlane.xlu0 %314
      %v316 = vsel %vm243, %v298, 0.0
      %317 = vadd.xlane.f32.xlu0 %v316
      %v318 = vpop.xlane.xlu0 %317
      %v319 = vsel %vm243, %v299, 0.0
      %320 = vadd.xlane.f32.xlu0 %v319
      %v321 = vpop.xlane.xlu0 %320
      %v322 = vsel %vm243, %v300, 0.0
      %323 = vadd.xlane.f32.xlu0 %v322
      %v324 = vpop.xlane.xlu0 %323
      %v325 = vadd.f32 %v285, %v303
      %v326 = vadd.f32 %v286, %v306
      %v327 = vadd.f32 %v287, %v309
      %v328 = vadd.f32 %v288, %v312
      %v329 = vadd.f32 %v289, %v315
      %v330 = vadd.f32 %v290, %v318
      %v331 = vadd.f32 %v291, %v321
      %v332 = vadd.f32 %v292, %v324
      %333 = vst.msk [vmem:[#allocation3] sm:$0xff] %vm276, %v325
      %334 = vst.msk [vmem:[#allocation3 + $0x8] sm:$0xff] %vm276, %v326
      %335 = vst.msk [vmem:[#allocation3 + $0x10] sm:$0xff] %vm276, %v327
      %336 = vst.msk [vmem:[#allocation3 + $0x18] sm:$0xff] %vm276, %v328
      %337 = vst.msk [vmem:[#allocation3 + $0x20] sm:$0xff] %vm276, %v329
      %338 = vst.msk [vmem:[#allocation3 + $0x28] sm:$0xff] %vm276, %v330
      %339 = vst.msk [vmem:[#allocation3 + $0x30] sm:$0xff] %vm276, %v331
      %340 = vst.msk [vmem:[#allocation3 + $0x38] sm:$0xff] %vm276, %v332
      %p341 = scmp.eq.s32.totalorder %s20, 1
      %p342 = pnand %p341, %p205
      %p343 = pneg %p342
      // Predicated region
      $region37: #{tpu_custom_call.1} parent=31 // pred_check
        _
      $region38: #{tpu_custom_call.1} parent=31 // pred_check_branch
        %345 = sbr.rel (%p342) target = $region40
      $region39: #{tpu_custom_call.1} parent=31 // pred_region
        %v346 = vld [vmem:[#allocation2] sm:$0xff]
        %v347 = vld [vmem:[#allocation2 + $0x8] sm:$0xff]
        %v348 = vld [vmem:[#allocation2 + $0x10] sm:$0xff]
        %v349 = vld [vmem:[#allocation2 + $0x18] sm:$0xff]
        %v350 = vld [vmem:[#allocation2 + $0x20] sm:$0xff]
        %v351 = vld [vmem:[#allocation2 + $0x28] sm:$0xff]
        %v352 = vld [vmem:[#allocation2 + $0x30] sm:$0xff]
        %v353 = vld [vmem:[#allocation2 + $0x38] sm:$0xff]
        %v354 = vmul.f32 %v346, 0.0078125
        %v355 = vmul.f32 %v347, 0.0078125
        %v356 = vmul.f32 %v348, 0.0078125
        %v357 = vmul.f32 %v349, 0.0078125
        %v358 = vmul.f32 %v350, 0.0078125
        %v359 = vmul.f32 %v351, 0.0078125
        %v360 = vmul.f32 %v352, 0.0078125
        %v361 = vmul.f32 %v353, 0.0078125
        %v362 = vld [vmem:[#allocation3] sm:$0xff]
        %v363 = vld [vmem:[#allocation3 + $0x8] sm:$0xff]
        %v364 = vld [vmem:[#allocation3 + $0x10] sm:$0xff]
        %v365 = vld [vmem:[#allocation3 + $0x18] sm:$0xff]
        %v366 = vld [vmem:[#allocation3 + $0x20] sm:$0xff]
        %v367 = vld [vmem:[#allocation3 + $0x28] sm:$0xff]
        %v368 = vld [vmem:[#allocation3 + $0x30] sm:$0xff]
        %v369 = vld [vmem:[#allocation3 + $0x38] sm:$0xff]
        %v370 = vmul.f32 %v362, 0.0078125
        %v371 = vmul.f32 %v363, 0.0078125
        %v372 = vmul.f32 %v364, 0.0078125
        %v373 = vmul.f32 %v365, 0.0078125
        %v374 = vmul.f32 %v366, 0.0078125
        %v375 = vmul.f32 %v367, 0.0078125
        %v376 = vmul.f32 %v368, 0.0078125
        %v377 = vmul.f32 %v369, 0.0078125
        %v378 = vmul.f32 %v354, %v354
        %v379 = vmul.f32 %v355, %v355
        %v380 = vmul.f32 %v356, %v356
        %v381 = vmul.f32 %v357, %v357
        %v382 = vmul.f32 %v358, %v358
        %v383 = vmul.f32 %v359, %v359
        %v384 = vmul.f32 %v360, %v360
        %v385 = vmul.f32 %v361, %v361
        %v386 = vsub.f32 %v370, %v378
        %v387 = vsub.f32 %v371, %v379
        %v388 = vsub.f32 %v372, %v380
        %v389 = vsub.f32 %v373, %v381
        %v390 = vsub.f32 %v374, %v382
        %v391 = vsub.f32 %v375, %v383
        %v392 = vsub.f32 %v376, %v384
        %v393 = vsub.f32 %v377, %v385
        %v394 = vmax.f32 %v386, 0.0
        %v395 = vmax.f32 %v387, 0.0
        %v396 = vmax.f32 %v388, 0.0
        %v397 = vmax.f32 %v389, 0.0
        %v398 = vmax.f32 %v390, 0.0
        %v399 = vmax.f32 %v391, 0.0
        %v400 = vmax.f32 %v392, 0.0
        %v401 = vmax.f32 %v393, 0.0
        %v402 = vld [vmem:[%s1] sm:$0xff]
        %v403 = vld [vmem:[%s1 + $0x8] sm:$0xff]
        %v404 = vld [vmem:[%s1 + $0x10] sm:$0xff]
        %v405 = vld [vmem:[%s1 + $0x18] sm:$0xff]
        %v406 = vld [vmem:[%s1 + $0x20] sm:$0xff]
        %v407 = vld [vmem:[%s1 + $0x28] sm:$0xff]
        %v408 = vld [vmem:[%s1 + $0x30] sm:$0xff]
        %v409 = vld [vmem:[%s1 + $0x38] sm:$0xff]
        %v410 = vadd.f32 %v394, 1e-05
        %v411 = vadd.f32 %v395, 1e-05
        %v412 = vadd.f32 %v396, 1e-05
        %v413 = vadd.f32 %v397, 1e-05
        %v414 = vadd.f32 %v398, 1e-05
        %v415 = vadd.f32 %v399, 1e-05
        %v416 = vadd.f32 %v400, 1e-05
        %v417 = vadd.f32 %v401, 1e-05
        %v418 = vrsqrt.pop %v410
        %v419 = vmul.f32 %v418, %v410
        %v420 = vmul.f32 %v419, %v418
        %v421 = vmul.f32 0.5, %v420
        %v422 = vsub.f32 1.5, %v421
        %v423 = vmul.f32 %v418, %v422
        %vm424 = vweird.f32 %v410
        %vm425 = vweird.f32 %v418
        %vm426 = vmor %vm424, %vm425
        %v427 = vsel %vm426, %v418, %v423
        %v428 = vrsqrt.pop %v411
        %v429 = vmul.f32 %v428, %v411
        %v430 = vmul.f32 %v429, %v428
        %v431 = vmul.f32 0.5, %v430
        %v432 = vsub.f32 1.5, %v431
        %v433 = vmul.f32 %v428, %v432
        %vm434 = vweird.f32 %v411
        %vm435 = vweird.f32 %v428
        %vm436 = vmor %vm434, %vm435
        %v437 = vsel %vm436, %v428, %v433
        %v438 = vrsqrt.pop %v412
        %v439 = vmul.f32 %v438, %v412
        %v440 = vmul.f32 %v439, %v438
        %v441 = vmul.f32 0.5, %v440
        %v442 = vsub.f32 1.5, %v441
        %v443 = vmul.f32 %v438, %v442
        %vm444 = vweird.f32 %v412
        %vm445 = vweird.f32 %v438
        %vm446 = vmor %vm444, %vm445
        %v447 = vsel %vm446, %v438, %v443
        %v448 = vrsqrt.pop %v413
        %v449 = vmul.f32 %v448, %v413
        %v450 = vmul.f32 %v449, %v448
        %v451 = vmul.f32 0.5, %v450
        %v452 = vsub.f32 1.5, %v451
        %v453 = vmul.f32 %v448, %v452
        %vm454 = vweird.f32 %v413
        %vm455 = vweird.f32 %v448
        %vm456 = vmor %vm454, %vm455
        %v457 = vsel %vm456, %v448, %v453
        %v458 = vrsqrt.pop %v414
        %v459 = vmul.f32 %v458, %v414
        %v460 = vmul.f32 %v459, %v458
        %v461 = vmul.f32 0.5, %v460
        %v462 = vsub.f32 1.5, %v461
        %v463 = vmul.f32 %v458, %v462
        %vm464 = vweird.f32 %v414
        %vm465 = vweird.f32 %v458
        %vm466 = vmor %vm464, %vm465
        %v467 = vsel %vm466, %v458, %v463
        %v468 = vrsqrt.pop %v415
        %v469 = vmul.f32 %v468, %v415
        %v470 = vmul.f32 %v469, %v468
        %v471 = vmul.f32 0.5, %v470
        %v472 = vsub.f32 1.5, %v471
        %v473 = vmul.f32 %v468, %v472
        %vm474 = vweird.f32 %v415
        %vm475 = vweird.f32 %v468
        %vm476 = vmor %vm474, %vm475
        %v477 = vsel %vm476, %v468, %v473
        %v478 = vrsqrt.pop %v416
        %v479 = vmul.f32 %v478, %v416
        %v480 = vmul.f32 %v479, %v478
        %v481 = vmul.f32 0.5, %v480
        %v482 = vsub.f32 1.5, %v481
        %v483 = vmul.f32 %v478, %v482
        %vm484 = vweird.f32 %v416
        %vm485 = vweird.f32 %v478
        %vm486 = vmor %vm484, %vm485
        %v487 = vsel %vm486, %v478, %v483
        %v488 = vrsqrt.pop %v417
        %v489 = vmul.f32 %v488, %v417
        %v490 = vmul.f32 %v489, %v488
        %v491 = vmul.f32 0.5, %v490
        %v492 = vsub.f32 1.5, %v491
        %v493 = vmul.f32 %v488, %v492
        %vm494 = vweird.f32 %v417
        %vm495 = vweird.f32 %v488
        %vm496 = vmor %vm494, %vm495
        %v497 = vsel %vm496, %v488, %v493
        %v498 = vmul.f32 %v402, %v427
        %v499 = vmul.f32 %v403, %v437
        %v500 = vmul.f32 %v404, %v447
        %v501 = vmul.f32 %v405, %v457
        %v502 = vmul.f32 %v406, %v467
        %v503 = vmul.f32 %v407, %v477
        %v504 = vmul.f32 %v408, %v487
        %v505 = vmul.f32 %v409, %v497
        %506 = vst.msk [vmem:[%s3] sm:$0xff] %vm276, %v498
        %507 = vst.msk [vmem:[%s3 + $0x8] sm:$0xff] %vm276, %v499
        %508 = vst.msk [vmem:[%s3 + $0x10] sm:$0xff] %vm276, %v500
        %509 = vst.msk [vmem:[%s3 + $0x18] sm:$0xff] %vm276, %v501
        %510 = vst.msk [vmem:[%s3 + $0x20] sm:$0xff] %vm276, %v502
        %511 = vst.msk [vmem:[%s3 + $0x28] sm:$0xff] %vm276, %v503
        %512 = vst.msk [vmem:[%s3 + $0x30] sm:$0xff] %vm276, %v504
        %513 = vst.msk [vmem:[%s3 + $0x38] sm:$0xff] %vm276, %v505
        %v514 = vld [vmem:[%s2] sm:$0xff]
        %v515 = vld [vmem:[%s2 + $0x8] sm:$0xff]
        %v516 = vld [vmem:[%s2 + $0x10] sm:$0xff]
        %v517 = vld [vmem:[%s2 + $0x18] sm:$0xff]
        %v518 = vld [vmem:[%s2 + $0x20] sm:$0xff]
        %v519 = vld [vmem:[%s2 + $0x28] sm:$0xff]
        %v520 = vld [vmem:[%s2 + $0x30] sm:$0xff]
        %v521 = vld [vmem:[%s2 + $0x38] sm:$0xff]
        %v522 = vmul.f32 %v354, %v498
        %v523 = vmul.f32 %v355, %v499
        %v524 = vmul.f32 %v356, %v500
        %v525 = vmul.f32 %v357, %v501
        %v526 = vmul.f32 %v358, %v502
        %v527 = vmul.f32 %v359, %v503
        %v528 = vmul.f32 %v360, %v504
        %v529 = vmul.f32 %v361, %v505
        %v530 = vsub.f32 %v514, %v522
        %v531 = vsub.f32 %v515, %v523
        %v532 = vsub.f32 %v516, %v524
        %v533 = vsub.f32 %v517, %v525
        %v534 = vsub.f32 %v518, %v526
        %v535 = vsub.f32 %v519, %v527
        %v536 = vsub.f32 %v520, %v528
        %v537 = vsub.f32 %v521, %v529
        %538 = vst.msk [vmem:[%s4] sm:$0xff] %vm276, %v530
        %539 = vst.msk [vmem:[%s4 + $0x8] sm:$0xff] %vm276, %v531
        %540 = vst.msk [vmem:[%s4 + $0x10] sm:$0xff] %vm276, %v532
        %541 = vst.msk [vmem:[%s4 + $0x18] sm:$0xff] %vm276, %v533
        %542 = vst.msk [vmem:[%s4 + $0x20] sm:$0xff] %vm276, %v534
        %543 = vst.msk [vmem:[%s4 + $0x28] sm:$0xff] %vm276, %v535
        %544 = vst.msk [vmem:[%s4 + $0x30] sm:$0xff] %vm276, %v536
        %545 = vst.msk [vmem:[%s4 + $0x38] sm:$0xff] %vm276, %v537
      $region40: #{tpu_custom_call.1} parent=31 // pred_fallthru
        _
      // Predicated region
      $region41: #{tpu_custom_call.1} parent=31 // pred_check
        %p546 = pneg %p111
      $region42: #{tpu_custom_call.1} parent=31 // pred_check_branch
        %548 = sbr.rel (%p546) target = $region44
      $region43: #{tpu_custom_call.1} parent=31 // pred_region
        _
      $region44: #{tpu_custom_call.1} parent=31 // pred_fallthru
        _
      // Predicated region
      $region45: #{tpu_custom_call.1} parent=31 // pred_check
        %p549 = pneg %p132
      $region46: #{tpu_custom_call.1} parent=31 // pred_check_branch
        %551 = sbr.rel (%p549) target = $region48
      $region47: #{tpu_custom_call.1} parent=31 // pred_region
        _
      $region48: #{tpu_custom_call.1} parent=31 // pred_fallthru
        _
      // Predicated region
      $region49: #{tpu_custom_call.1} parent=31 // pred_check
        %p552 = pneg %p111
      $region50: #{tpu_custom_call.1} parent=31 // pred_check_branch
        %554 = sbr.rel (%p552) target = $region52
      $region51: #{tpu_custom_call.1} parent=31 // pred_region
        _
      $region52: #{tpu_custom_call.1} parent=31 // pred_fallthru
        _
      // Predicated region
      $region53: #{tpu_custom_call.1} parent=31 // pred_check
        %p555 = pneg %p132
      $region54: #{tpu_custom_call.1} parent=31 // pred_check_branch
        %557 = sbr.rel (%p555) target = $region56
      $region55: #{tpu_custom_call.1} parent=31 // pred_region
        _
      $region56: #{tpu_custom_call.1} parent=31 // pred_fallthru
        _
    $region32: #{tpu_custom_call.1} parent=5 // pred_fallthru
      _
    %p558 = scmp.le.s32.totalorder 2, %s11
    // Predicated region
    $region57: #{tpu_custom_call.1} parent=5 // pred_check
      %p559 = pneg %p558
    $region58: #{tpu_custom_call.1} parent=5 // pred_check_branch
      %561 = sbr.rel (%p559) target = $region60
    $region59: #{tpu_custom_call.1} parent=5 // pred_region
      %s562 = ssub.s32 %s11, 2
    $region60: #{tpu_custom_call.1} parent=5 // pred_fallthru
      _
  $region6: #{tpu_custom_call.1} parent=0 // loop_footer
    %s15 = sadd.s32 1, %s11
  $region7: #{tpu_custom_call.1} parent=0 // loop_footer_branch
    %10 = sbr.rel target = $region3
  $region8: #{tpu_custom_call.1} parent=0 // loop_exit
    _

</llo_original>
